<compile_context>
chip_gen: v7x
topology: tpu7x:2x2x1
jax: 0.10.0
libtpu: 0.0.40
codegen_flags: <defaults>
</compile_context>

<pallas_src>
import functools

import jax
import jax.numpy as jnp
from jax.experimental import pallas as pl
from jax.experimental.pallas import tpu as pltpu


def _round_up(x: int, m: int) -> int:
    return (x + m - 1) // m * m


def _vmem_budget_bytes() -> int:
    """Residency budget derived from physical VMEM (v7x-safe fallback)."""
    try:
        cap = int(pltpu.get_tpu_info().vmem_capacity_bytes)
    except Exception:
        cap = 64 * 2**20  # assume v7x (the tightest generation) if the query fails
    return int(min(max(cap - 24 * 2**20, 24 * 2**20), 96 * 2**20))


def _footprint_bytes(tm: int, th: int, dp: int, itemsize: int, multi: bool) -> int:
    io = 4 * tm * dp * itemsize                   # x + out tiles, double buffered
    w = 2 * 2 * (dp * th + th * dp)               # bf16 W1 + W2 slices, double buffered
    scratch = (4 + 2) * tm * dp if multi else 0   # f32 accumulator + bf16 x cache
    biases = 2 * 4 * (th + dp)
    return io + w + scratch + biases


def _select_geometry(rows, D, H, itemsize, tile_m_req, tile_h_req, budget):
    """Pick (tile_m, tile_h, dp, multi_step) under the VMEM budget."""
    sub = {4: 8, 2: 16, 1: 32}.get(itemsize, 8)   # dtype-dependent sublane multiple
    dp = _round_up(D, 128)
    hp_full = _round_up(H, 128)
    tm_cap = _round_up(rows, sub)

    def clamp_tm(tm):
        return max(sub, min(_round_up(tm, sub), tm_cap))

    if tile_h_req is not None:                    # explicit request (also used for testing)
        th = min(_round_up(tile_h_req, 128), hp_full)
        return clamp_tm(tile_m_req), th, dp, th < hp_full

    # Preferred: full-H resident weights (single reduction step, no accumulator,
    # W1/W2 streamed from HBM exactly once for the whole kernel).
    for tm in (tile_m_req, 512, 384, 256, 128):
        tm = clamp_tm(tm)
        if _footprint_bytes(tm, hp_full, dp, itemsize, False) <= budget:
            return tm, hp_full, dp, False

    # Fallback: tile the hidden dim (reduction axis, multiples of 256) and accumulate.
    for th in (1024, 512, 256):
        for tm in (tile_m_req, 512, 256, 128):
            tm = clamp_tm(tm)
            if _footprint_bytes(tm, th, dp, itemsize, True) <= budget:
                return tm, th, dp, True

    return clamp_tm(128), 256, dp, True


def _instance_norm_rows(y, d_true, out_dtype):
    """Per-row InstanceNorm1d (affine=False, eps=1e-5, biased var) over the true D columns.

    `y` has padded feature width dp >= d_true; the padded columns are exactly zero
    (zero-padded x / W2 columns / b2), so sum(y)/d_true is the true mean.  The variance is
    two-pass ((y-mean)^2) with padded columns masked out.
    """
    inv_d = 1.0 / d_true
    mean = jnp.sum(y, axis=-1, keepdims=True) * inv_d
    centered = y - mean
    if y.shape[-1] != d_true:
        col = jax.lax.broadcasted_iota(jnp.int32, y.shape, dimension=y.ndim - 1)
        centered = jnp.where(col < d_true, centered, 0.0)
    var = jnp.sum(centered * centered, axis=-1, keepdims=True) * inv_d
    return (centered * jax.lax.rsqrt(var + 1e-5)).astype(out_dtype)


def _ffn_kernel_resident(x_ref, w1_ref, b1_ref, w2_ref, b2_ref, o_ref, *, d_true):
    """Single-step path: full hidden dim resident in VMEM, no accumulator."""
    x = x_ref[...]
    x_bf = x.astype(jnp.bfloat16)
    # Linear 1 on the MXU: bf16 operands, f32 accumulation.
    h = jnp.dot(x_bf, w1_ref[...], preferred_element_type=jnp.float32)
    h = h + b1_ref[...].astype(jnp.float32)
    # Hardswish (f32 VPU; kept f32 for v5e which lacks bf16 VALU).
    h = h * jnp.clip(h + 3.0, 0.0, 6.0) * (1.0 / 6.0)
    # Linear 2 + residual.
    y = jnp.dot(h.astype(jnp.bfloat16), w2_ref[...], preferred_element_type=jnp.float32)
    y = y + b2_ref[...].astype(jnp.float32) + x.astype(jnp.float32)
    o_ref[...] = _instance_norm_rows(y, d_true, o_ref.dtype)


def _ffn_kernel_tiled(x_ref, w1_ref, b1_ref, w2_ref, b2_ref, o_ref,
                      acc_ref, xbf_ref, *, d_true):
    """Tiled-reduction path: hidden dim split over an 'arbitrary' grid axis."""
    h_idx = pl.program_id(1)

    # Cache the bf16 cast of the row tile once per row tile (reused over all h steps).
    @pl.when(h_idx == 0)
    def _():
        xbf_ref[...] = x_ref[...].astype(jnp.bfloat16)

    h = jnp.dot(xbf_ref[...], w1_ref[...], preferred_element_type=jnp.float32)
    h = h + b1_ref[...].astype(jnp.float32)
    h = h * jnp.clip(h + 3.0, 0.0, 6.0) * (1.0 / 6.0)
    part = jnp.dot(h.astype(jnp.bfloat16), w2_ref[...], preferred_element_type=jnp.float32)

    # First-step init with the partial product (saves a full zero-store + reload pass).
    @pl.when(h_idx == 0)
    def _():
        acc_ref[...] = part

    @pl.when(h_idx != 0)
    def _():
        acc_ref[...] += part

    @pl.when(h_idx == pl.num_programs(1) - 1)
    def _():
        y = acc_ref[...] + b2_ref[...].astype(jnp.float32) + x_ref[...].astype(jnp.float32)
        o_ref[...] = _instance_norm_rows(y, d_true, o_ref.dtype)


@functools.partial(jax.jit, static_argnames=("tile_m", "tile_h"))
def position_wise_feed_forward(x, w1, b1, w2, b2, *, tile_m=512, tile_h=None):
    """x: (B, S, D); w1: (D, H); b1: (H,); w2: (H, D); b2: (D,). Returns (B, S, D)."""
    B, S, D = x.shape
    H = w1.shape[1]
    rows = B * S
    itemsize = jnp.dtype(x.dtype).itemsize

    budget = _vmem_budget_bytes()
    tm, th, dp, multi = _select_geometry(rows, D, H, itemsize, tile_m, tile_h, budget)
    hp = _round_up(H, th)
    rows_p = _round_up(rows, tm)

    # Zero padding everywhere: this is what keeps padded y columns exactly zero, which the
    # per-row mean over the padded width relies on (see _instance_norm_rows).
    x2d = jnp.pad(x.reshape(rows, D), ((0, rows_p - rows), (0, dp - D)))
    w1p = jnp.pad(w1, ((0, dp - D), (0, hp - H))).astype(jnp.bfloat16)
    w2p = jnp.pad(w2, ((0, hp - H), (0, dp - D))).astype(jnp.bfloat16)
    b1p = jnp.pad(b1, (0, hp - H)).reshape(1, hp).astype(jnp.float32)
    b2p = jnp.pad(b2, (0, dp - D)).reshape(1, dp).astype(jnp.float32)

    n_row_tiles = rows_p // tm
    weight_bytes = 2 * (dp * hp + hp * dp)                      # bf16 W1 + W2
    weight_traffic = weight_bytes * (n_row_tiles if multi else 1)
    cost = pl.CostEstimate(
        flops=4 * rows_p * dp * hp + 4 * rows_p * hp + 10 * rows_p * dp,
        transcendentals=rows_p,                                  # one rsqrt per row
        bytes_accessed=(2 * rows_p * dp * itemsize               # x in, out
                        + weight_traffic                         # honest restream count
                        + 4 * (hp + dp)))                        # f32 biases

    footprint = _footprint_bytes(tm, th, dp, itemsize, multi)
    vmem_limit = int(min(100 * 2**20, max(32 * 2**20, footprint + 12 * 2**20)))

    kernel = functools.partial(
        _ffn_kernel_tiled if multi else _ffn_kernel_resident, d_true=D)

    if multi:
        grid = (n_row_tiles, hp // th)
        in_specs = [
            pl.BlockSpec((tm, dp), lambda i, h: (i, 0)),   # x rows (resident over h)
            pl.BlockSpec((dp, th), lambda i, h: (0, h)),   # W1 hidden slice
            pl.BlockSpec((1, th), lambda i, h: (0, h)),    # b1 hidden slice
            pl.BlockSpec((th, dp), lambda i, h: (h, 0)),   # W2 hidden slice
            pl.BlockSpec((1, dp), lambda i, h: (0, 0)),    # b2 (grid-invariant)
        ]
        out_specs = pl.BlockSpec((tm, dp), lambda i, h: (i, 0))
        scratch = [pltpu.VMEM((tm, dp), jnp.float32),      # f32 accumulator
                   pltpu.VMEM((tm, dp), jnp.bfloat16)]     # cached bf16 x tile
        dims = ("parallel", "arbitrary")
    else:
        # All weight/bias blocks are grid-invariant -> DMA'd from HBM exactly once.
        grid = (n_row_tiles,)
        in_specs = [
            pl.BlockSpec((tm, dp), lambda i: (i, 0)),
            pl.BlockSpec((dp, hp), lambda i: (0, 0)),
            pl.BlockSpec((1, hp), lambda i: (0, 0)),
            pl.BlockSpec((hp, dp), lambda i: (0, 0)),
            pl.BlockSpec((1, dp), lambda i: (0, 0)),
        ]
        out_specs = pl.BlockSpec((tm, dp), lambda i: (i, 0))
        scratch = []
        dims = ("parallel",)

    out2d = pl.pallas_call(
        kernel,
        out_shape=jax.ShapeDtypeStruct((rows_p, dp), x.dtype),
        grid_spec=pltpu.PrefetchScalarGridSpec(
            num_scalar_prefetch=0,
            grid=grid,
            in_specs=in_specs,
            out_specs=out_specs,
            scratch_shapes=scratch),
        compiler_params=pltpu.CompilerParams(
            dimension_semantics=dims,
            vmem_limit_bytes=vmem_limit),
        cost_estimate=cost,
    )(x2d, w1p, b1p, w2p, b2p)

    return out2d[:rows, :D].reshape(B, S, D)


def _reference_f32(x, w1, b1, w2, b2):
    """Pure-f32 JAX reference mirroring the PyTorch forward exactly."""
    xf = x.astype(jnp.float32)
    h = xf @ w1 + b1
    h = h * jnp.clip(h + 3.0, 0.0, 6.0) / 6.0
    y = h @ w2 + b2 + xf
    mean = jnp.mean(y, axis=-1, keepdims=True)
    var = jnp.mean((y - mean) ** 2, axis=-1, keepdims=True)
    return ((y - mean) / jnp.sqrt(var + 1e-5)).astype(x.dtype)


def _reference_bf16(x, w1, b1, w2, b2):
    """Reference using the same bf16-operand / f32-accumulate matmuls as the kernel."""
    xf = x.astype(jnp.float32)
    h = jnp.dot(x.astype(jnp.bfloat16), w1.astype(jnp.bfloat16),
                preferred_element_type=jnp.float32) + b1
    h = h * jnp.clip(h + 3.0, 0.0, 6.0) * (1.0 / 6.0)
    y = jnp.dot(h.astype(jnp.bfloat16), w2.astype(jnp.bfloat16),
                preferred_element_type=jnp.float32) + b2 + xf
    mean = jnp.mean(y, axis=-1, keepdims=True)
    var = jnp.mean((y - mean) ** 2, axis=-1, keepdims=True)
    return ((y - mean) * jax.lax.rsqrt(var + 1e-5)).astype(x.dtype)


def _make_case(key, B, S, D, H):
    kx, kw1, kb1, kw2, kb2 = jax.random.split(key, 5)
    lim1 = 1.0 / float(D) ** 0.5
    lim2 = 1.0 / float(H) ** 0.5
    w1 = jax.random.uniform(kw1, (D, H), jnp.float32, -lim1, lim1)   # Linear1 weight^T
    b1 = jax.random.uniform(kb1, (H,), jnp.float32, -lim1, lim1)
    w2 = jax.random.uniform(kw2, (H, D), jnp.float32, -lim2, lim2)   # Linear2 weight^T
    b2 = jax.random.uniform(kb2, (D,), jnp.float32, -lim2, lim2)
    x = jax.random.normal(kx, (B, S, D), jnp.float32)
    return x, w1, b1, w2, b2


if __name__ == "__main__":
    key = jax.random.PRNGKey(0)
    k0, k1 = jax.random.split(key)

    # Case 1: lane-aligned dims (batch=2, seq=8, input=128, hidden=256)
    #         -> resident-weight (single reduction step) fast path.
    x, w1, b1, w2, b2 = _make_case(k0, 2, 8, 128, 256)
    out = jax.block_until_ready(position_wise_feed_forward(x, w1, b1, w2, b2))
    assert out.shape == x.shape
    assert jnp.allclose(out, _reference_bf16(x, w1, b1, w2, b2), atol=2e-3, rtol=2e-3)
    assert jnp.allclose(out, _reference_f32(x, w1, b1, w2, b2), atol=5e-2, rtol=5e-2)

    # Case 2: ragged dims -> exercises row/feature padding and the masked variance.
    xr, w1r, b1r, w2r, b2r = _make_case(k1, 2, 5, 96, 160)
    outr = jax.block_until_ready(position_wise_feed_forward(xr, w1r, b1r, w2r, b2r))
    assert outr.shape == xr.shape
    assert jnp.allclose(outr, _reference_bf16(xr, w1r, b1r, w2r, b2r), atol=2e-3, rtol=2e-3)
    assert jnp.allclose(outr, _reference_f32(xr, w1r, b1r, w2r, b2r), atol=5e-2, rtol=5e-2)

    # Case 3: force the tiled-reduction (accumulator) path so it stays tested.
    outm = jax.block_until_ready(
        position_wise_feed_forward(x, w1, b1, w2, b2, tile_h=128))
    assert outm.shape == x.shape
    assert jnp.allclose(outm, _reference_bf16(x, w1, b1, w2, b2), atol=2e-3, rtol=2e-3)
    assert jnp.allclose(outm, _reference_f32(x, w1, b1, w2, b2), atol=5e-2, rtol=5e-2)

    print("KERNEL_OK")
</pallas_src>

<mosaic_0001>
module attributes {stable_mosaic.version = 11 : i64} {
  func.func @_ffn_kernel_resident(%arg0: i32, %arg1: memref<16x128xf32, #tpu.memory_space<vmem>>, %arg2: memref<128x256xbf16, #tpu.memory_space<vmem>>, %arg3: memref<1x256xf32, #tpu.memory_space<vmem>>, %arg4: memref<256x128xbf16, #tpu.memory_space<vmem>>, %arg5: memref<1x128xf32, #tpu.memory_space<vmem>>, %arg6: memref<16x128xf32, #tpu.memory_space<vmem>>) attributes {dimension_semantics = [#tpu.dimension_semantics<parallel>], iteration_bounds = array<i64: 1>, scalar_prefetch = 0 : i64, scratch_operands = 0 : i64, tpu.core_type = #tpu.core_type<tc>, window_params = [{transform_indices = @transform_0, window_bounds = array<i64: 16, 128>}, {pipeline_mode = #tpu.pipeline_mode<synchronous>, transform_indices = @transform_1, window_bounds = array<i64: 128, 256>}, {pipeline_mode = #tpu.pipeline_mode<synchronous>, transform_indices = @transform_2, window_bounds = array<i64: 1, 256>}, {pipeline_mode = #tpu.pipeline_mode<synchronous>, transform_indices = @transform_3, window_bounds = array<i64: 256, 128>}, {pipeline_mode = #tpu.pipeline_mode<synchronous>, transform_indices = @transform_4, window_bounds = array<i64: 1, 128>}, {transform_indices = @transform_5, window_bounds = array<i64: 16, 128>}]} {
    %c0 = arith.constant 0 : index
    %c0_0 = arith.constant 0 : index
    %0 = vector.load %arg1[%c0, %c0_0] : memref<16x128xf32, #tpu.memory_space<vmem>>, vector<16x128xf32>
    %1 = arith.truncf %0 : vector<16x128xf32> to vector<16x128xbf16>
    %c0_1 = arith.constant 0 : index
    %c0_2 = arith.constant 0 : index
    %2 = vector.load %arg2[%c0_1, %c0_2] : memref<128x256xbf16, #tpu.memory_space<vmem>>, vector<128x256xbf16>
    %cst = arith.constant dense<0.000000e+00> : vector<16x256xf32>
    %3 = tpu.matmul %1, %2, %cst {dimension_numbers = #tpu.dot_dimension_numbers<[1], [0], [0], [1], [0, 0, 1, 1], [], []>} : vector<16x128xbf16>, vector<128x256xbf16>, vector<16x256xf32> -> vector<16x256xf32>
    %c0_3 = arith.constant 0 : index
    %c0_4 = arith.constant 0 : index
    %4 = vector.load %arg3[%c0_3, %c0_4] : memref<1x256xf32, #tpu.memory_space<vmem>>, vector<1x256xf32>
    %5 = vector.broadcast %4 : vector<1x256xf32> to vector<16x256xf32>
    %6 = arith.addf %3, %5 : vector<16x256xf32>
    %cst_5 = arith.constant 3.000000e+00 : f32
    %7 = vector.broadcast %cst_5 : f32 to vector<16x256xf32>
    %8 = arith.addf %6, %7 : vector<16x256xf32>
    %cst_6 = arith.constant 0.000000e+00 : f32
    %cst_7 = arith.constant 6.000000e+00 : f32
    %9 = vector.broadcast %cst_6 : f32 to vector<16x256xf32>
    %10 = arith.maximumf %9, %8 : vector<16x256xf32>
    %11 = vector.broadcast %cst_7 : f32 to vector<16x256xf32>
    %12 = arith.minimumf %11, %10 : vector<16x256xf32>
    %13 = arith.mulf %6, %12 : vector<16x256xf32>
    %cst_8 = arith.constant 0.166666672 : f32
    %14 = vector.broadcast %cst_8 : f32 to vector<16x256xf32>
    %15 = arith.mulf %13, %14 : vector<16x256xf32>
    %16 = arith.truncf %15 : vector<16x256xf32> to vector<16x256xbf16>
    %c0_9 = arith.constant 0 : index
    %c0_10 = arith.constant 0 : index
    %17 = vector.load %arg4[%c0_9, %c0_10] : memref<256x128xbf16, #tpu.memory_space<vmem>>, vector<256x128xbf16>
    %cst_11 = arith.constant dense<0.000000e+00> : vector<16x128xf32>
    %18 = tpu.matmul %16, %17, %cst_11 {dimension_numbers = #tpu.dot_dimension_numbers<[1], [0], [0], [1], [0, 0, 1, 1], [], []>} : vector<16x256xbf16>, vector<256x128xbf16>, vector<16x128xf32> -> vector<16x128xf32>
    %c0_12 = arith.constant 0 : index
    %c0_13 = arith.constant 0 : index
    %19 = vector.load %arg5[%c0_12, %c0_13] : memref<1x128xf32, #tpu.memory_space<vmem>>, vector<1x128xf32>
    %20 = vector.broadcast %19 : vector<1x128xf32> to vector<16x128xf32>
    %21 = arith.addf %18, %20 : vector<16x128xf32>
    %22 = arith.addf %21, %0 : vector<16x128xf32>
    %cst_14 = arith.constant dense<0.000000e+00> : vector<16xf32>
    %23 = vector.multi_reduction <add>, %22, %cst_14 [1] : vector<16x128xf32> to vector<16xf32>
    %24 = vector.shape_cast %23 : vector<16xf32> to vector<16x1xf32>
    %cst_15 = arith.constant 7.812500e-03 : f32
    %25 = vector.broadcast %cst_15 : f32 to vector<16x1xf32>
    %26 = arith.mulf %24, %25 : vector<16x1xf32>
    %27 = vector.broadcast %26 : vector<16x1xf32> to vector<16x128xf32>
    %28 = arith.subf %22, %27 : vector<16x128xf32>
    %29 = arith.mulf %28, %28 : vector<16x128xf32>
    %cst_16 = arith.constant dense<0.000000e+00> : vector<16xf32>
    %30 = vector.multi_reduction <add>, %29, %cst_16 [1] : vector<16x128xf32> to vector<16xf32>
    %31 = vector.shape_cast %30 : vector<16xf32> to vector<16x1xf32>
    %cst_17 = arith.constant 7.812500e-03 : f32
    %32 = vector.broadcast %cst_17 : f32 to vector<16x1xf32>
    %33 = arith.mulf %31, %32 : vector<16x1xf32>
    %cst_18 = arith.constant 9.99999974E-6 : f32
    %34 = vector.broadcast %cst_18 : f32 to vector<16x1xf32>
    %35 = arith.addf %33, %34 : vector<16x1xf32>
    %36 = math.rsqrt %35 : vector<16x1xf32>
    %37 = vector.broadcast %36 : vector<16x1xf32> to vector<16x128xf32>
    %38 = arith.mulf %28, %37 : vector<16x128xf32>
    %c0_19 = arith.constant 0 : index
    %c0_20 = arith.constant 0 : index
    %39 = vector.load %arg6[%c0_19, %c0_20] : memref<16x128xf32, #tpu.memory_space<vmem>>, vector<16x128xf32>
    tpu.vector_store %arg6[%c0_19, %c0_20], %38 {strides = array<i32>} : memref<16x128xf32, #tpu.memory_space<vmem>>, vector<16x128xf32>,
    return
  }
  func.func @transform_0(%arg0: i32) -> (i32, i32) {
    %c0_i32 = arith.constant 0 : i32
    %c0_i32_0 = arith.constant 0 : i32
    return %arg0, %c0_i32 : i32, i32
  }
  func.func @transform_1(%arg0: i32) -> (i32, i32) {
    %c0_i32 = arith.constant 0 : i32
    %c0_i32_0 = arith.constant 0 : i32
    %c0_i32_1 = arith.constant 0 : i32
    return %c0_i32, %c0_i32_0 : i32, i32
  }
  func.func @transform_2(%arg0: i32) -> (i32, i32) {
    %c0_i32 = arith.constant 0 : i32
    %c0_i32_0 = arith.constant 0 : i32
    %c0_i32_1 = arith.constant 0 : i32
    return %c0_i32, %c0_i32_0 : i32, i32
  }
  func.func @transform_3(%arg0: i32) -> (i32, i32) {
    %c0_i32 = arith.constant 0 : i32
    %c0_i32_0 = arith.constant 0 : i32
    %c0_i32_1 = arith.constant 0 : i32
    return %c0_i32, %c0_i32_0 : i32, i32
  }
  func.func @transform_4(%arg0: i32) -> (i32, i32) {
    %c0_i32 = arith.constant 0 : i32
    %c0_i32_0 = arith.constant 0 : i32
    %c0_i32_1 = arith.constant 0 : i32
    return %c0_i32, %c0_i32_0 : i32, i32
  }
  func.func @transform_5(%arg0: i32) -> (i32, i32) {
    %c0_i32 = arith.constant 0 : i32
    %c0_i32_0 = arith.constant 0 : i32
    return %arg0, %c0_i32 : i32, i32
  }
}

</mosaic_0001>

<llo_original>
// kernel: position_wise_feed_forward.1
$region0: #{position_wise_feed_forward.1}
  #allocation0 [shape = 'u32[]', space=smem, size = 0x4, offset = 0x4, fixed_abs, tag = 'smem constant byte address 0x4 - core index']
  #allocation1 [shape = 'u32[144,128]{1,0:T(1,128)}', space=vmem, size = 0x12000, scoped, tag = 'internal scratch']
  %s0 = inlined_call_operand.vmem [shape: f32[16,128], index: 0, kind: input, shape index: {}]
  %s1 = inlined_call_operand.vmem [shape: bf16[128,256], index: 1, kind: input, shape index: {}]
  %s2 = inlined_call_operand.vmem [shape: f32[1,256], index: 2, kind: input, shape index: {}]
  %s3 = inlined_call_operand.vmem [shape: bf16[256,128], index: 3, kind: input, shape index: {}]
  %s4 = inlined_call_operand.vmem [shape: f32[1,128], index: 4, kind: input, shape index: {}]
  %s5 = inlined_call_operand.hbm [shape: f32[16,128], index: 5, kind: output, shape index: {}]
  %s6 = sld [smem:[#allocation0]]
  $region30: #{position_wise_feed_forward.1} parent=0
    _
  %s8 = ssub.s32 1, %s6
  %s9 = scalar_select 0, %s8, %s6
  $region1: #{position_wise_feed_forward.1} parent=0
    #allocation2 [shape = 'u8[8192]{0}', space=vmem, size = 0x2000, scoped, tag = 'output window, operand 0, single buffered']
    #allocation3 [shape = 's32[1]{0}', space=sflag, size = 0x4, scoped, tag = 'scoped memory for position_wise_feed_forward.1']
    %10 = vsyncpa [#allocation3], 0
    // Predicated region
    $region2: #{position_wise_feed_forward.1} parent=1 // pred_check
      _
    $region3: #{position_wise_feed_forward.1} parent=1 // pred_check_branch
      %12 = sbr.rel (0) target = $region5
    $region4: #{position_wise_feed_forward.1} parent=1 // pred_region
      _
    $region5: #{position_wise_feed_forward.1} parent=1 // pred_fallthru
      _
    // Predicated region
    $region6: #{position_wise_feed_forward.1} parent=1 // pred_check
      _
    $region7: #{position_wise_feed_forward.1} parent=1 // pred_check_branch
      %14 = sbr.rel (0) target = $region9
    $region8: #{position_wise_feed_forward.1} parent=1 // pred_region
      _
    $region9: #{position_wise_feed_forward.1} parent=1 // pred_fallthru
      _
    // Predicated region
    $region10: #{position_wise_feed_forward.1} parent=1 // pred_check
      _
    $region11: #{position_wise_feed_forward.1} parent=1 // pred_check_branch
      %16 = sbr.rel (0) target = $region13
    $region12: #{position_wise_feed_forward.1} parent=1 // pred_region
      _
    $region13: #{position_wise_feed_forward.1} parent=1 // pred_fallthru
      _
    // Predicated region
    $region14: #{position_wise_feed_forward.1} parent=1 // pred_check
      _
    $region15: #{position_wise_feed_forward.1} parent=1 // pred_check_branch
      %18 = sbr.rel (0) target = $region17
    $region16: #{position_wise_feed_forward.1} parent=1 // pred_region
      _
    $region17: #{position_wise_feed_forward.1} parent=1 // pred_fallthru
      _
    // Predicated region
    $region18: #{position_wise_feed_forward.1} parent=1 // pred_check
      _
    $region19: #{position_wise_feed_forward.1} parent=1 // pred_check_branch
      %20 = sbr.rel (0) target = $region21
    $region20: #{position_wise_feed_forward.1} parent=1 // pred_region
      _
    $region21: #{position_wise_feed_forward.1} parent=1 // pred_fallthru
      _
    %v22 = vld [vmem:[%s0] sm:$0xff]
    %v23 = vld [vmem:[%s0 + $0x8] sm:$0xff]
    %v24 = vpack.c.bf16 %v23, %v22
    %v25 = vld [vmem:[%s1] sm:$0xff]
    %v26 = vld [vmem:[%s1 + $0x8] sm:$0xff]
    %v27 = vld [vmem:[%s1 + $0x10] sm:$0xff]
    %v28 = vld [vmem:[%s1 + $0x18] sm:$0xff]
    %v29 = vld [vmem:[%s1 + $0x20] sm:$0xff]
    %v30 = vld [vmem:[%s1 + $0x28] sm:$0xff]
    %v31 = vld [vmem:[%s1 + $0x30] sm:$0xff]
    %v32 = vld [vmem:[%s1 + $0x38] sm:$0xff]
    %v33 = vld [vmem:[%s1 + $0x40] sm:$0xff]
    %v34 = vld [vmem:[%s1 + $0x48] sm:$0xff]
    %v35 = vld [vmem:[%s1 + $0x50] sm:$0xff]
    %v36 = vld [vmem:[%s1 + $0x58] sm:$0xff]
    %v37 = vld [vmem:[%s1 + $0x60] sm:$0xff]
    %v38 = vld [vmem:[%s1 + $0x68] sm:$0xff]
    %v39 = vld [vmem:[%s1 + $0x70] sm:$0xff]
    %v40 = vld [vmem:[%s1 + $0x78] sm:$0xff]
    %v41 = vld [vmem:[%s2] sm:$0x3]
    %v43 = vlaneseq
    %v44 = vshrl.u32 %v43, 7
    %v45 = vsub.s32 0, %v44
    %v46 = vrot.slane %v41, %v45
    %v47 = vlaneseq
    %v48 = vshrl.u32 %v47, 7
    %v49 = vsub.s32 1, %v48
    %v50 = vrot.slane %v41, %v49
    %v69 = vunpack.c.l.b16 %v25
    %v70 = vunpack.c.h.b16 %v25
    %v71 = vunpack.c.l.b16 %v26
    %v72 = vunpack.c.h.b16 %v26
    %v73 = vunpack.c.l.b16 %v27
    %v74 = vunpack.c.h.b16 %v27
    %v75 = vunpack.c.l.b16 %v28
    %v76 = vunpack.c.h.b16 %v28
    %v77 = vunpack.c.l.b16 %v29
    %v78 = vunpack.c.h.b16 %v29
    %v79 = vunpack.c.l.b16 %v30
    %v80 = vunpack.c.h.b16 %v30
    %v81 = vunpack.c.l.b16 %v31
    %v82 = vunpack.c.h.b16 %v31
    %v83 = vunpack.c.l.b16 %v32
    %v84 = vunpack.c.h.b16 %v32
    %v85 = vunpack.c.l.b16 %v33
    %v86 = vunpack.c.h.b16 %v33
    %v87 = vunpack.c.l.b16 %v34
    %v88 = vunpack.c.h.b16 %v34
    %v89 = vunpack.c.l.b16 %v35
    %v90 = vunpack.c.h.b16 %v35
    %v91 = vunpack.c.l.b16 %v36
    %v92 = vunpack.c.h.b16 %v36
    %v93 = vunpack.c.l.b16 %v37
    %v94 = vunpack.c.h.b16 %v37
    %v95 = vunpack.c.l.b16 %v38
    %v96 = vunpack.c.h.b16 %v38
    %v97 = vunpack.c.l.b16 %v39
    %v98 = vunpack.c.h.b16 %v39
    %v99 = vunpack.c.l.b16 %v40
    %v100 = vunpack.c.h.b16 %v40
    %v101 = vpack.c.b16 %v71, %v69
    %v102 = vpack.c.b16 %v72, %v70
    %v103 = vpack.c.b16 %v75, %v73
    %v104 = vpack.c.b16 %v76, %v74
    %v105 = vpack.c.b16 %v79, %v77
    %v106 = vpack.c.b16 %v80, %v78
    %v107 = vpack.c.b16 %v83, %v81
    %v108 = vpack.c.b16 %v84, %v82
    %v109 = vpack.c.b16 %v87, %v85
    %v110 = vpack.c.b16 %v88, %v86
    %v111 = vpack.c.b16 %v91, %v89
    %v112 = vpack.c.b16 %v92, %v90
    %v113 = vpack.c.b16 %v95, %v93
    %v114 = vpack.c.b16 %v96, %v94
    %v115 = vpack.c.b16 %v99, %v97
    %v116 = vpack.c.b16 %v100, %v98
    %133 = vmatprep.subr.bf16.mxu0 %v102
    %134 = vmatpush1.bf16.msra.mxu0 %v101
    %135 = vmatprep.subr.bf16.mxu0 %v104
    %136 = vmatpush1.bf16.msra.mxu0 %v103
    %137 = vmatprep.subr.bf16.mxu0 %v106
    %138 = vmatpush1.bf16.msra.mxu0 %v105
    %139 = vmatprep.subr.bf16.mxu0 %v108
    %140 = vmatpush1.bf16.msra.mxu0 %v107
    %141 = vmatprep.subr.bf16.mxu0 %v110
    %142 = vmatpush1.bf16.msra.mxu0 %v109
    %143 = vmatprep.subr.bf16.mxu0 %v112
    %144 = vmatpush1.bf16.msra.mxu0 %v111
    %145 = vmatprep.subr.bf16.mxu0 %v114
    %146 = vmatpush1.bf16.msra.mxu0 %v113
    %147 = vmatprep.subr.bf16.mxu0 %v116
    %148 = vmatpush1.bf16.msra.mxu0 %v115
    %149 = vmatprep.subr.bf16.mxu0 0
    %150 = vmatpush1.bf16.msra.mxu0 0
    %151 = vmatprep.subr.bf16.mxu0 0
    %152 = vmatpush1.bf16.msra.mxu0 0
    %153 = vmatprep.subr.bf16.mxu0 0
    %154 = vmatpush1.bf16.msra.mxu0 0
    %155 = vmatprep.subr.bf16.mxu0 0
    %156 = vmatpush1.bf16.msra.mxu0 0
    %157 = vmatprep.subr.bf16.mxu0 0
    %158 = vmatpush1.bf16.msra.mxu0 0
    %159 = vmatprep.subr.bf16.mxu0 0
    %160 = vmatpush1.bf16.msra.mxu0 0
    %161 = vmatprep.subr.bf16.mxu0 0
    %162 = vmatpush1.bf16.msra.mxu0 0
    %163 = vmatprep.subr.bf16.mxu0 0
    %164 = vmatpush1.bf16.msra.mxu0 0
    %165 = vmatprep.mubr.bf16.mxu0 0
    %166 = vmatmul.mubr.bf16.gmra.mrb[0].mxu0 %v24
    %v167 = vpop.f32.mrb[0].mxu0
    %v168 = vadd.f32 %v46, %v167
    %v169 = vpop.f32.mrb[0].mxu0
    %v170 = vadd.f32 %v50, %v169
    %v171 = vpop.f32.mrb[0].mxu0
    %v172 = vadd.f32 %v46, %v171
    %v173 = vpop.f32.mrb[0].mxu0
    %v174 = vadd.f32 %v50, %v173
    %175 = vdwg.mxu0
    %v176 = vadd.f32 %v168, 3.0
    %v177 = vadd.f32 %v170, 3.0
    %v178 = vadd.f32 %v172, 3.0
    %v179 = vadd.f32 %v174, 3.0
    %v180 = vmax.f32 %v176, 0.0
    %v181 = vmax.f32 %v177, 0.0
    %v182 = vmax.f32 %v178, 0.0
    %v183 = vmax.f32 %v179, 0.0
    %v184 = vmin.f32 %v180, 6.0
    %v185 = vmin.f32 %v181, 6.0
    %v186 = vmin.f32 %v182, 6.0
    %v187 = vmin.f32 %v183, 6.0
    %v188 = vmul.f32 %v168, %v184
    %v189 = vmul.f32 %v170, %v185
    %v190 = vmul.f32 %v172, %v186
    %v191 = vmul.f32 %v174, %v187
    %v192 = vmul.f32 %v188, 0.16666667
    %v193 = vmul.f32 %v189, 0.16666667
    %v194 = vmul.f32 %v190, 0.16666667
    %v195 = vmul.f32 %v191, 0.16666667
    %v196 = vpack.c.bf16 %v194, %v192
    %v197 = vpack.c.bf16 %v195, %v193
    %v198 = vld [vmem:[%s3] sm:$0xf]
    %v199 = vld [vmem:[%s3 + $0x4] sm:$0xf]
    %v200 = vld [vmem:[%s3 + $0x8] sm:$0xf]
    %v201 = vld [vmem:[%s3 + $0xc] sm:$0xf]
    %v202 = vld [vmem:[%s3 + $0x10] sm:$0xf]
    %v203 = vld [vmem:[%s3 + $0x14] sm:$0xf]
    %v204 = vld [vmem:[%s3 + $0x18] sm:$0xf]
    %v205 = vld [vmem:[%s3 + $0x1c] sm:$0xf]
    %v206 = vld [vmem:[%s3 + $0x20] sm:$0xf]
    %v207 = vld [vmem:[%s3 + $0x24] sm:$0xf]
    %v208 = vld [vmem:[%s3 + $0x28] sm:$0xf]
    %v209 = vld [vmem:[%s3 + $0x2c] sm:$0xf]
    %v210 = vld [vmem:[%s3 + $0x30] sm:$0xf]
    %v211 = vld [vmem:[%s3 + $0x34] sm:$0xf]
    %v212 = vld [vmem:[%s3 + $0x38] sm:$0xf]
    %v213 = vld [vmem:[%s3 + $0x3c] sm:$0xf]
    %v214 = vld [vmem:[%s3 + $0x40] sm:$0xf]
    %v215 = vld [vmem:[%s3 + $0x44] sm:$0xf]
    %v216 = vld [vmem:[%s3 + $0x48] sm:$0xf]
    %v217 = vld [vmem:[%s3 + $0x4c] sm:$0xf]
    %v218 = vld [vmem:[%s3 + $0x50] sm:$0xf]
    %v219 = vld [vmem:[%s3 + $0x54] sm:$0xf]
    %v220 = vld [vmem:[%s3 + $0x58] sm:$0xf]
    %v221 = vld [vmem:[%s3 + $0x5c] sm:$0xf]
    %v222 = vld [vmem:[%s3 + $0x60] sm:$0xf]
    %v223 = vld [vmem:[%s3 + $0x64] sm:$0xf]
    %v224 = vld [vmem:[%s3 + $0x68] sm:$0xf]
    %v225 = vld [vmem:[%s3 + $0x6c] sm:$0xf]
    %v226 = vld [vmem:[%s3 + $0x70] sm:$0xf]
    %v227 = vld [vmem:[%s3 + $0x74] sm:$0xf]
    %v228 = vld [vmem:[%s3 + $0x78] sm:$0xf]
    %v229 = vld [vmem:[%s3 + $0x7c] sm:$0xf]
    %v230 = vld [vmem:[%s4] sm:$0x1]
    %v232 = vlaneseq
    %v233 = vshrl.u32 %v232, 7
    %v234 = vsub.s32 0, %v233
    %v235 = vrot.slane %v230, %v234
    %v269 = vunpack.c.l.b16 %v198
    %v270 = vunpack.c.l.b16 %v199
    %v271 = vunpack.c.l.b16 %v200
    %v272 = vunpack.c.l.b16 %v201
    %v273 = vunpack.c.l.b16 %v202
    %v274 = vunpack.c.l.b16 %v203
    %v275 = vunpack.c.l.b16 %v204
    %v276 = vunpack.c.l.b16 %v205
    %v277 = vunpack.c.l.b16 %v206
    %v278 = vunpack.c.l.b16 %v207
    %v279 = vunpack.c.l.b16 %v208
    %v280 = vunpack.c.l.b16 %v209
    %v281 = vunpack.c.l.b16 %v210
    %v282 = vunpack.c.l.b16 %v211
    %v283 = vunpack.c.l.b16 %v212
    %v284 = vunpack.c.l.b16 %v213
    %v285 = vunpack.c.l.b16 %v214
    %v286 = vunpack.c.l.b16 %v215
    %v287 = vunpack.c.l.b16 %v216
    %v288 = vunpack.c.l.b16 %v217
    %v289 = vunpack.c.l.b16 %v218
    %v290 = vunpack.c.l.b16 %v219
    %v291 = vunpack.c.l.b16 %v220
    %v292 = vunpack.c.l.b16 %v221
    %v293 = vunpack.c.l.b16 %v222
    %v294 = vunpack.c.l.b16 %v223
    %v295 = vunpack.c.l.b16 %v224
    %v296 = vunpack.c.l.b16 %v225
    %v297 = vunpack.c.l.b16 %v226
    %v298 = vunpack.c.l.b16 %v227
    %v299 = vunpack.c.l.b16 %v228
    %v300 = vunpack.c.l.b16 %v229
    %v301 = vpack.c.b16 %v270, %v269
    %v302 = vpack.c.b16 %v272, %v271
    %v303 = vpack.c.b16 %v274, %v273
    %v304 = vpack.c.b16 %v276, %v275
    %v305 = vpack.c.b16 %v278, %v277
    %v306 = vpack.c.b16 %v280, %v279
    %v307 = vpack.c.b16 %v282, %v281
    %v308 = vpack.c.b16 %v284, %v283
    %v309 = vpack.c.b16 %v286, %v285
    %v310 = vpack.c.b16 %v288, %v287
    %v311 = vpack.c.b16 %v290, %v289
    %v312 = vpack.c.b16 %v292, %v291
    %v313 = vpack.c.b16 %v294, %v293
    %v314 = vpack.c.b16 %v296, %v295
    %v315 = vpack.c.b16 %v298, %v297
    %v316 = vpack.c.b16 %v300, %v299
    %333 = vmatprep.subr.bf16.mxu0 0
    %334 = vmatpush1.bf16.msra.mxu0 %v301
    %335 = vmatprep.subr.bf16.mxu0 0
    %336 = vmatpush1.bf16.msra.mxu0 %v302
    %337 = vmatprep.subr.bf16.mxu0 0
    %338 = vmatpush1.bf16.msra.mxu0 %v303
    %339 = vmatprep.subr.bf16.mxu0 0
    %340 = vmatpush1.bf16.msra.mxu0 %v304
    %341 = vmatprep.subr.bf16.mxu0 0
    %342 = vmatpush1.bf16.msra.mxu0 %v305
    %343 = vmatprep.subr.bf16.mxu0 0
    %344 = vmatpush1.bf16.msra.mxu0 %v306
    %345 = vmatprep.subr.bf16.mxu0 0
    %346 = vmatpush1.bf16.msra.mxu0 %v307
    %347 = vmatprep.subr.bf16.mxu0 0
    %348 = vmatpush1.bf16.msra.mxu0 %v308
    %349 = vmatprep.subr.bf16.mxu0 0
    %350 = vmatpush1.bf16.msra.mxu0 %v309
    %351 = vmatprep.subr.bf16.mxu0 0
    %352 = vmatpush1.bf16.msra.mxu0 %v310
    %353 = vmatprep.subr.bf16.mxu0 0
    %354 = vmatpush1.bf16.msra.mxu0 %v311
    %355 = vmatprep.subr.bf16.mxu0 0
    %356 = vmatpush1.bf16.msra.mxu0 %v312
    %357 = vmatprep.subr.bf16.mxu0 0
    %358 = vmatpush1.bf16.msra.mxu0 %v313
    %359 = vmatprep.subr.bf16.mxu0 0
    %360 = vmatpush1.bf16.msra.mxu0 %v314
    %361 = vmatprep.subr.bf16.mxu0 0
    %362 = vmatpush1.bf16.msra.mxu0 %v315
    %363 = vmatprep.subr.bf16.mxu0 0
    %364 = vmatpush1.bf16.msra.mxu0 %v316
    %365 = vmatprep.mubr.bf16.mxu0 %v197
    %366 = vmatmul.mubr.bf16.gmra.mrb[0].mxu0 %v196
    %v367 = vpop.f32.mrb[0].mxu0
    %v368 = vadd.f32 %v235, %v367
    %v369 = vpop.f32.mrb[0].mxu0
    %v370 = vpop.f32.mrb[0].mxu0
    %v371 = vadd.f32 %v235, %v370
    %v372 = vpop.f32.mrb[0].mxu0
    %373 = vdwg.mxu0
    %v374 = vadd.f32 %v368, %v22
    %v375 = vadd.f32 %v371, %v23
    %376 = vadd.xlane.f32.xlu0 %v374
    %v377 = vpop.xlane.xlu0 %376
    %378 = vadd.xlane.f32.xlu0 %v375
    %v379 = vpop.xlane.xlu0 %378
    %v380 = vmul.f32 %v377, 0.0078125
    %v381 = vmul.f32 %v379, 0.0078125
    %v382 = vsub.f32 %v374, %v380
    %v383 = vsub.f32 %v375, %v381
    %v384 = vmul.f32 %v382, %v382
    %v385 = vmul.f32 %v383, %v383
    %386 = vadd.xlane.f32.xlu0 %v384
    %v387 = vpop.xlane.xlu0 %386
    %388 = vadd.xlane.f32.xlu0 %v385
    %v389 = vpop.xlane.xlu0 %388
    %v390 = vmul.f32 %v387, 0.0078125
    %v391 = vmul.f32 %v389, 0.0078125
    %v392 = vadd.f32 %v390, 1e-05
    %v393 = vadd.f32 %v391, 1e-05
    %v394 = vrsqrt.pop %v392
    %v395 = vrsqrt.pop %v393
    %v396 = vmul.f32 %v382, %v394
    %v397 = vmul.f32 %v383, %v395
    %398 = vst [vmem:[#allocation2] sm:$0xff] %v396
    %399 = vst [vmem:[#allocation2 + $0x8] sm:$0xff] %v397
    // Predicated region
    $region22: #{position_wise_feed_forward.1} parent=1 // pred_check
      _
    $region23: #{position_wise_feed_forward.1} parent=1 // pred_check_branch
      %401 = sbr.rel (0) target = $region25
    $region24: #{position_wise_feed_forward.1} parent=1 // pred_region
      %s403 = ssub.s32 256, 256
      %404 = vsyncadd [#allocation3], %s403
      %s405 = sshll.u32 [#allocation2], 4
      %s406 = int_to_ptr.vmem [resolvable:$true] %s405
      %411 = dma.vmem_to_hbm [thread:$0]  %s406, 256, %s5, [#allocation3], 128, 128, 8
    $region25: #{position_wise_feed_forward.1} parent=1 // pred_fallthru
      _
    // Predicated region
    $region26: #{position_wise_feed_forward.1} parent=1 // pred_check
      _
    $region27: #{position_wise_feed_forward.1} parent=1 // pred_check_branch
      %413 = sbr.rel (0) target = $region29
    $region28: #{position_wise_feed_forward.1} parent=1 // pred_region
      %414 = dma.done [#allocation3], 256
    $region29: #{position_wise_feed_forward.1} parent=1 // pred_fallthru
      _
    %415 = vsyncpa [#allocation3], 1

</llo_original>
